<compile_context>
chip_gen: v7x
topology: tpu7x:2x2x1
jax: 0.10.0
libtpu: 0.0.40
codegen_flags: <defaults>
</compile_context>

<pallas_src>
import jax
import jax.numpy as jnp
from jax import lax
from jax.experimental import pallas as pl
from jax.experimental.pallas import tpu as pltpu

_MIB = 1 << 20
# Planning budget for the (double-buffered) blocks of a single pallas_call.
# Kept well under v7x's 64 MiB physical VMEM.
_BLOCK_BUDGET = 28 * _MIB


def _bspec(shape, index_map, *, buffers=None):
    """BlockSpec, optionally requesting an explicit pipeline buffer count.

    Blocks whose index map is constant along the inner grid axis never change,
    so their second pipeline buffer is dead VMEM; buffers=1 single-buffers
    them (matters most on v7x's 64 MiB VMEM).  Falls back to the default
    double-buffered spec if this JAX version does not support pipeline_mode.
    """
    if buffers is None or not hasattr(pl, "Buffered"):
        return pl.BlockSpec(shape, index_map)
    try:
        return pl.BlockSpec(shape, index_map, pipeline_mode=pl.Buffered(buffers))
    except (TypeError, AttributeError):
        return pl.BlockSpec(shape, index_map)


def _pick_lane_tile(dim, cap):
    """Tile for a lane-minor (last) dim.

    Returns `dim` when it already fits under `cap`; otherwise the largest
    multiple-of-128 divisor of `dim` that is <= cap (always exists when dim is
    a multiple of 128).  Falls back to the full dim (compile-safe) only when
    dim has no multiple-of-128 divisor <= cap.
    """
    dim = int(dim)
    cap = max(int(cap), 128)
    if dim <= cap:
        return dim
    best = 0
    t = 128
    while t <= cap:
        if dim % t == 0:
            best = t
        t += 128
    return best if best else dim


def _compiler_params(semantics, need_bytes):
    """dimension_semantics + explicit vmem_limit_bytes from real block sizes."""
    limit = max(int(need_bytes) * 3 // 2 + 2 * _MIB, 16 * _MIB)
    return pltpu.CompilerParams(dimension_semantics=semantics,
                                vmem_limit_bytes=limit)


# --------------------------------------------------------------------------
# Kernels
# --------------------------------------------------------------------------
def _hidden_kernel(emb_ref, w1_ref, b1_ref, h_ref):
    # h[:, pj] = tanh(emb @ W1[:, pj] + b1[:, pj]).  Computed once for all
    # pre_seq_len rows (hoisted out of the O-tile loop).  Accumulate + bias +
    # tanh in f32 (v5e EUP/VPU have no bf16).
    acc = jnp.dot(emb_ref[...], w1_ref[...], preferred_element_type=jnp.float32)
    h_ref[...] = jnp.tanh(acc + b1_ref[...]).astype(h_ref.dtype)


def _table_kernel(h_ref, w2_ref, b2_ref, out_ref):
    # table[:, oj] = h @ W2[:, oj] + b2[:, oj].  h is VMEM-resident and
    # single-buffered; only W2/b2/out stream per O tile.
    acc = jnp.dot(h_ref[...], w2_ref[...], preferred_element_type=jnp.float32)
    out_ref[...] = (acc + b2_ref[...]).astype(out_ref.dtype)


def _gather_kernel(idx_ref, table_ref, out_ref):
    # Batched gather of TM rows from the VMEM-resident (S, TO) table tile via
    # a one-hot MXU matmul: (TM, S) @ (S, TO) -> (TM, TO).  Exact in f32
    # (each output element is a single product by 1.0).
    tm = idx_ref.shape[0]
    s = table_ref.shape[0]
    onehot = (idx_ref[...] ==
              lax.broadcasted_iota(jnp.int32, (tm, s), 1)).astype(table_ref.dtype)
    out_ref[...] = jnp.dot(onehot, table_ref[...],
                           preferred_element_type=jnp.float32
                           ).astype(out_ref.dtype)


# --------------------------------------------------------------------------
# Wrapper
# --------------------------------------------------------------------------
def prefix_encoder_forward(prefix, params, *, prefix_projection=True,
                           token_tile=256, o_tile_max=4096,
                           compute_dtype=jnp.float32):
    """prefix: (B, L) int -> (B, L, 2*layers*hidden).

    compute_dtype=jnp.bfloat16 is the v6e/v7x production setting (halves
    table/output HBM traffic, ~2x MXU rate); it is not bit-exact vs f32.
    """
    B, L = prefix.shape
    N = B * L
    cb = jnp.dtype(compute_dtype).itemsize

    if prefix_projection:
        emb = params["embedding"].astype(compute_dtype)
        w1 = params["w1"].astype(compute_dtype)
        b1 = params["b1"].astype(jnp.float32)
        w2 = params["w2"].astype(compute_dtype)
        b2 = params["b2"].astype(jnp.float32)
        S, H = emb.shape
        P = w1.shape[1]
        O = w2.shape[1]

        # ---- Stage 1a: h = tanh(emb @ W1 + b1), once, tiled along P.
        tp_cap = (_BLOCK_BUDGET - 2 * S * H * cb) // (2 * cb * (H + S) + 8)
        tp = _pick_lane_tile(P, min(8192, tp_cap))
        need_1a = 2 * (S * H * cb + H * tp * cb + tp * 4 + S * tp * cb)
        h = pl.pallas_call(
            _hidden_kernel,
            out_shape=jax.ShapeDtypeStruct((S, P), compute_dtype),
            grid=(P // tp,),
            in_specs=[
                _bspec((S, H), lambda pj: (0, 0), buffers=1),   # resident
                _bspec((H, tp), lambda pj: (0, pj)),
                _bspec((1, tp), lambda pj: (0, pj)),
            ],
            out_specs=pl.BlockSpec((S, tp), lambda pj: (0, pj)),
            compiler_params=_compiler_params(("parallel",), need_1a),
        )(emb, w1, b1)

        # ---- Stage 1b: table = h @ W2 + b2, tiled along O.
        to1_cap = (_BLOCK_BUDGET - 2 * S * P * cb) // (2 * cb * (P + S) + 8)
        to1 = _pick_lane_tile(O, min(o_tile_max, to1_cap))
        need_1b = 2 * (S * P * cb + P * to1 * cb + to1 * 4 + S * to1 * cb)
        table = pl.pallas_call(
            _table_kernel,
            out_shape=jax.ShapeDtypeStruct((S, O), compute_dtype),
            grid=(O // to1,),
            in_specs=[
                _bspec((S, P), lambda oj: (0, 0), buffers=1),   # resident
                _bspec((P, to1), lambda oj: (0, oj)),
                _bspec((1, to1), lambda oj: (0, oj)),
            ],
            out_specs=pl.BlockSpec((S, to1), lambda oj: (0, oj)),
            compiler_params=_compiler_params(("parallel",), need_1b),
        )(h, w2, b2)
        # TODO(synk): optionally fuse stage 1b into the gather (compute the
        # (S, TO) table tile into VMEM scratch under pl.when(ti == 0)) to skip
        # the table's HBM round-trip for small B*L.
    else:
        # Direct gather branch: keep the embedding's native dtype (matches the
        # PyTorch reference's dtype behaviour on this path).
        table = params["embedding"]
        S, O = table.shape

    tb = jnp.dtype(table.dtype).itemsize

    # ---- Stage 2: batched gather of the table rows selected by `prefix`.
    TM = int(token_tile)
    if N < TM:
        TM = max(8, -(-N // 8) * 8)
    num_t = -(-N // TM)
    N_pad = num_t * TM
    flat_idx = jnp.zeros((N_pad, 1), jnp.int32)
    flat_idx = flat_idx.at[:N, 0].set(prefix.reshape(N).astype(jnp.int32))

    to2_cap = (_BLOCK_BUDGET - TM * S * 4 - 2 * TM * 4) // (2 * tb * (S + TM))
    to2 = _pick_lane_tile(O, min(o_tile_max, to2_cap))
    num_o = O // to2
    need_2 = 2 * (TM * 4 + S * to2 * tb + TM * to2 * tb) + TM * S * 4

    out = pl.pallas_call(
        _gather_kernel,
        out_shape=jax.ShapeDtypeStruct((N_pad, O), table.dtype),
        # O axis outer / token axis inner: the (S, TO) table tile keeps a
        # constant block index along `ti`, so it stays VMEM-resident across
        # all token tiles (no per-token data-dependent HBM DMAs).
        grid=(num_o, num_t),
        in_specs=[
            _bspec((TM, 1), lambda oj, ti: (ti, 0)),
            _bspec((S, to2), lambda oj, ti: (0, oj), buffers=1),  # resident
        ],
        out_specs=pl.BlockSpec((TM, to2), lambda oj, ti: (ti, oj)),
        compiler_params=_compiler_params(("parallel", "parallel"), need_2),
    )(flat_idx, table)

    return out[:N].reshape(B, L, O)


def _reference_forward(prefix, params, *, prefix_projection=True):
    """Pure-JAX reference mirroring the PyTorch forward."""
    emb = params["embedding"]
    tok = jnp.take(emb, prefix, axis=0)                  # (B, L, H) or (B, L, O)
    if not prefix_projection:
        return tok
    h = jnp.tanh(tok @ params["w1"] + params["b1"][0])
    return h @ params["w2"] + params["b2"][0]


if __name__ == "__main__":
    # Small config consistent with the module:
    #   pre_seq_len=16, hidden_size=32, prefix_hidden_size=64,
    #   num_hidden_layers=2  ->  output dim O = 2*2*32 = 128
    pre_seq_len = 16
    hidden_size = 32
    prefix_hidden_size = 64
    num_hidden_layers = 2
    out_dim = num_hidden_layers * 2 * hidden_size
    batch, prefix_len = 2, 8

    key = jax.random.PRNGKey(0)
    k_emb, k_w1, k_b1, k_w2, k_b2, k_idx = jax.random.split(key, 6)

    params = {
        "embedding": jax.random.normal(
            k_emb, (pre_seq_len, hidden_size), jnp.float32) * 0.02,
        "w1": jax.random.normal(
            k_w1, (hidden_size, prefix_hidden_size), jnp.float32) * 0.05,
        "b1": jax.random.normal(
            k_b1, (1, prefix_hidden_size), jnp.float32) * 0.01,
        "w2": jax.random.normal(
            k_w2, (prefix_hidden_size, out_dim), jnp.float32) * 0.05,
        "b2": jax.random.normal(
            k_b2, (1, out_dim), jnp.float32) * 0.01,
    }
    prefix = jax.random.randint(
        k_idx, (batch, prefix_len), 0, pre_seq_len, dtype=jnp.int32)

    # f32 (exact-parity) projection path.
    out = jax.block_until_ready(
        prefix_encoder_forward(prefix, params, prefix_projection=True))
    ref = _reference_forward(prefix, params, prefix_projection=True)
    assert out.shape == (batch, prefix_len, out_dim), out.shape
    assert jnp.allclose(out, ref, atol=1e-5, rtol=1e-5), "projection mismatch"

    # Non-projection branch (width-O embedding gathered directly, dtype kept).
    params_np = {
        "embedding": jax.random.normal(
            k_emb, (pre_seq_len, out_dim), jnp.float32) * 0.02,
    }
    out_np = jax.block_until_ready(
        prefix_encoder_forward(prefix, params_np, prefix_projection=False))
    ref_np = _reference_forward(prefix, params_np, prefix_projection=False)
    assert out_np.dtype == params_np["embedding"].dtype
    assert jnp.allclose(out_np, ref_np, atol=1e-6), "gather mismatch"

    # bf16 compute path (v6e/v7x production setting) -- loose tolerance.
    out_bf16 = jax.block_until_ready(
        prefix_encoder_forward(prefix, params, prefix_projection=True,
                               compute_dtype=jnp.bfloat16))
    assert out_bf16.dtype == jnp.bfloat16
    assert jnp.allclose(out_bf16.astype(jnp.float32), ref,
                        atol=2e-2), "bf16 path diverged"

    print("KERNEL_OK")
</pallas_src>

<mosaic_0001>
module attributes {stable_mosaic.version = 11 : i64} {
  func.func @_hidden_kernel(%arg0: i32, %arg1: memref<16x32xf32, #tpu.memory_space<vmem>>, %arg2: memref<32x64xf32, #tpu.memory_space<vmem>>, %arg3: memref<1x64xf32, #tpu.memory_space<vmem>>, %arg4: memref<16x64xf32, #tpu.memory_space<vmem>>) attributes {dimension_semantics = [#tpu.dimension_semantics<parallel>], iteration_bounds = array<i64: 1>, scalar_prefetch = 0 : i64, scratch_operands = 0 : i64, tpu.core_type = #tpu.core_type<tc>, window_params = [{pipeline_mode = #tpu.pipeline_mode<synchronous>, transform_indices = @transform_0, window_bounds = array<i64: 16, 32>}, {transform_indices = @transform_1, window_bounds = array<i64: 32, 64>}, {transform_indices = @transform_2, window_bounds = array<i64: 1, 64>}, {transform_indices = @transform_3, window_bounds = array<i64: 16, 64>}]} {
    %c0 = arith.constant 0 : index
    %c0_0 = arith.constant 0 : index
    %0 = vector.load %arg1[%c0, %c0_0] : memref<16x32xf32, #tpu.memory_space<vmem>>, vector<16x32xf32>
    %c0_1 = arith.constant 0 : index
    %c0_2 = arith.constant 0 : index
    %1 = vector.load %arg2[%c0_1, %c0_2] : memref<32x64xf32, #tpu.memory_space<vmem>>, vector<32x64xf32>
    %cst = arith.constant dense<0.000000e+00> : vector<16x64xf32>
    %2 = tpu.matmul %0, %1, %cst {dimension_numbers = #tpu.dot_dimension_numbers<[1], [0], [0], [1], [0, 0, 1, 1], [], []>} : vector<16x32xf32>, vector<32x64xf32>, vector<16x64xf32> -> vector<16x64xf32>
    %c0_3 = arith.constant 0 : index
    %c0_4 = arith.constant 0 : index
    %3 = vector.load %arg3[%c0_3, %c0_4] : memref<1x64xf32, #tpu.memory_space<vmem>>, vector<1x64xf32>
    %4 = vector.broadcast %3 : vector<1x64xf32> to vector<16x64xf32>
    %5 = arith.addf %2, %4 : vector<16x64xf32>
    %6 = math.tanh %5 : vector<16x64xf32>
    %c0_5 = arith.constant 0 : index
    %c0_6 = arith.constant 0 : index
    %7 = vector.load %arg4[%c0_5, %c0_6] : memref<16x64xf32, #tpu.memory_space<vmem>>, vector<16x64xf32>
    tpu.vector_store %arg4[%c0_5, %c0_6], %6 {strides = array<i32>} : memref<16x64xf32, #tpu.memory_space<vmem>>, vector<16x64xf32>,
    return
  }
  func.func @transform_0(%arg0: i32) -> (i32, i32) {
    %c0_i32 = arith.constant 0 : i32
    %c0_i32_0 = arith.constant 0 : i32
    %c0_i32_1 = arith.constant 0 : i32
    return %c0_i32, %c0_i32_0 : i32, i32
  }
  func.func @transform_1(%arg0: i32) -> (i32, i32) {
    %c0_i32 = arith.constant 0 : i32
    %c0_i32_0 = arith.constant 0 : i32
    return %c0_i32, %arg0 : i32, i32
  }
  func.func @transform_2(%arg0: i32) -> (i32, i32) {
    %c0_i32 = arith.constant 0 : i32
    %c0_i32_0 = arith.constant 0 : i32
    return %c0_i32, %arg0 : i32, i32
  }
  func.func @transform_3(%arg0: i32) -> (i32, i32) {
    %c0_i32 = arith.constant 0 : i32
    %c0_i32_0 = arith.constant 0 : i32
    return %c0_i32, %arg0 : i32, i32
  }
}

</mosaic_0001>

<llo_original>
// kernel: tpu_custom_call.1
$region0: #{tpu_custom_call.1}
  #allocation0 [shape = 'u32[]', space=smem, size = 0x4, offset = 0x4, fixed_abs, tag = 'smem constant byte address 0x4 - core index']
  #allocation1 [shape = 'u32[144,128]{1,0:T(1,128)}', space=vmem, size = 0x12000, scoped, tag = 'internal scratch']
  %s0 = inlined_call_operand.hbm [shape: f32[16,32], index: 0, kind: input, shape index: {}]
  %s1 = inlined_call_operand.hbm [shape: f32[32,64], index: 1, kind: input, shape index: {}]
  %s2 = inlined_call_operand.vmem [shape: f32[1,64], index: 2, kind: input, shape index: {}]
  %s3 = inlined_call_operand.hbm [shape: f32[16,64], index: 3, kind: output, shape index: {}]
  %s4 = sld [smem:[#allocation0]]
  $region30: #{tpu_custom_call.1} parent=0
    _
  %s6 = ssub.s32 1, %s4
  %s7 = scalar_select 0, %s6, %s4
  $region1: #{tpu_custom_call.1} parent=0
    #allocation2 [shape = 'u8[8192]{0}', space=vmem, size = 0x2000, scoped, tag = 'input window, operand 0, single buffered']
    #allocation3 [shape = 's32[1]{0}', space=sflag, size = 0x4, scoped, tag = 'scoped memory for tpu_custom_call.1']
    #allocation4 [shape = 's32[1]{0}', space=sflag, size = 0x4, scoped, tag = 'scoped memory for tpu_custom_call.1']
    #allocation5 [shape = 'u8[16384]{0}', space=vmem, size = 0x4000, scoped, tag = 'input window, operand 1, single buffered']
    #allocation6 [shape = 's32[1]{0}', space=sflag, size = 0x4, scoped, tag = 'scoped memory for tpu_custom_call.1']
    #allocation7 [shape = 'u8[8192]{0}', space=vmem, size = 0x2000, scoped, tag = 'output window, operand 0, single buffered']
    %8 = vsyncpa [#allocation3], 0
    %9 = vsyncpa [#allocation6], 0
    %10 = vsyncpa [#allocation4], 0
    // Predicated region
    $region2: #{tpu_custom_call.1} parent=1 // pred_check
      _
    $region3: #{tpu_custom_call.1} parent=1 // pred_check_branch
      %12 = sbr.rel (0) target = $region5
    $region4: #{tpu_custom_call.1} parent=1 // pred_region
      %s14 = ssub.s32 256, 256
      %15 = vsyncadd [#allocation3], %s14
      %s16 = sshll.u32 [#allocation2], 4
      %s17 = int_to_ptr.vmem [resolvable:$true] %s16
      %22 = dma.hbm_to_vmem [thread:$0]  %s0, 256, %s17, [#allocation3], 128, 128, 8
    $region5: #{tpu_custom_call.1} parent=1 // pred_fallthru
      _
    // Predicated region
    $region6: #{tpu_custom_call.1} parent=1 // pred_check
      _
    $region7: #{tpu_custom_call.1} parent=1 // pred_check_branch
      %24 = sbr.rel (0) target = $region9
    $region8: #{tpu_custom_call.1} parent=1 // pred_region
      %s26 = ssub.s32 512, 512
      %27 = vsyncadd [#allocation6], %s26
      %s28 = sshll.u32 [#allocation5], 4
      %s29 = int_to_ptr.vmem [resolvable:$true] %s28
      %34 = dma.hbm_to_vmem [thread:$0]  %s1, 512, %s29, [#allocation6], 128, 128, 8
    $region9: #{tpu_custom_call.1} parent=1 // pred_fallthru
      _
    // Predicated region
    $region10: #{tpu_custom_call.1} parent=1 // pred_check
      _
    $region11: #{tpu_custom_call.1} parent=1 // pred_check_branch
      %36 = sbr.rel (0) target = $region13
    $region12: #{tpu_custom_call.1} parent=1 // pred_region
      _
    $region13: #{tpu_custom_call.1} parent=1 // pred_fallthru
      _
    // Predicated region
    $region14: #{tpu_custom_call.1} parent=1 // pred_check
      _
    $region15: #{tpu_custom_call.1} parent=1 // pred_check_branch
      %38 = sbr.rel (0) target = $region17
    $region16: #{tpu_custom_call.1} parent=1 // pred_region
      %39 = dma.done [#allocation3], 256
    $region17: #{tpu_custom_call.1} parent=1 // pred_fallthru
      _
    // Predicated region
    $region18: #{tpu_custom_call.1} parent=1 // pred_check
      _
    $region19: #{tpu_custom_call.1} parent=1 // pred_check_branch
      %41 = sbr.rel (0) target = $region21
    $region20: #{tpu_custom_call.1} parent=1 // pred_region
      %42 = dma.done [#allocation6], 512
    $region21: #{tpu_custom_call.1} parent=1 // pred_fallthru
      _
    %v43 = vld [vmem:[#allocation2] sm:$0xff]
    %v44 = vld [vmem:[#allocation2 + $0x8] sm:$0xff]
    %v45 = vld [vmem:[#allocation5] sm:$0xff]
    %v46 = vld [vmem:[#allocation5 + $0x8] sm:$0xff]
    %v47 = vld [vmem:[#allocation5 + $0x10] sm:$0xff]
    %v48 = vld [vmem:[#allocation5 + $0x18] sm:$0xff]
    %v49 = vld [vmem:[%s2] sm:$0x1]
    %v51 = vlaneseq
    %v52 = vshrl.u32 %v51, 7
    %v53 = vsub.s32 0, %v52
    %v54 = vrot.slane %v49, %v53
    %vm56 = vcmask 261120
    %v58 = vsel %vm56, %v43, 0
    %v61 = vsel %vm56, %v44, 0
    %63 = vmatprep.subr.mxu0 0.0
    %64 = vmatpush1.msra.mxu0 %v45
    %65 = vmatprep.subr.mxu0 0.0
    %66 = vmatpush1.msra.mxu0 %v46
    %67 = vmatprep.subr.mxu0 0.0
    %68 = vmatpush1.msra.mxu0 %v47
    %69 = vmatprep.subr.mxu0 0.0
    %70 = vmatpush1.msra.mxu0 %v48
    %71 = vmatprep.subr.mxu0 0.0
    %72 = vmatpush1.msra.mxu0 0.0
    %73 = vmatprep.subr.mxu0 0.0
    %74 = vmatpush1.msra.mxu0 0.0
    %75 = vmatprep.subr.mxu0 0.0
    %76 = vmatpush1.msra.mxu0 0.0
    %77 = vmatprep.subr.mxu0 0.0
    %78 = vmatpush1.msra.mxu0 0.0
    %79 = vmatprep.subr.mxu0 0.0
    %80 = vmatpush1.msra.mxu0 0.0
    %81 = vmatprep.subr.mxu0 0.0
    %82 = vmatpush1.msra.mxu0 0.0
    %83 = vmatprep.subr.mxu0 0.0
    %84 = vmatpush1.msra.mxu0 0.0
    %85 = vmatprep.subr.mxu0 0.0
    %86 = vmatpush1.msra.mxu0 0.0
    %87 = vmatprep.subr.mxu0 0.0
    %88 = vmatpush1.msra.mxu0 0.0
    %89 = vmatprep.subr.mxu0 0.0
    %90 = vmatpush1.msra.mxu0 0.0
    %91 = vmatprep.subr.mxu0 0.0
    %92 = vmatpush1.msra.mxu0 0.0
    %93 = vmatprep.subr.mxu0 0.0
    %94 = vmatpush1.msra.mxu0 0.0
    %95 = vmatprep.subr.mxu0 0.0
    %96 = vmatpush1.msra.mxu0 0.0
    %97 = vmatprep.subr.mxu0 0.0
    %98 = vmatpush1.msra.mxu0 0.0
    %99 = vmatprep.subr.mxu0 0.0
    %100 = vmatpush1.msra.mxu0 0.0
    %101 = vmatprep.subr.mxu0 0.0
    %102 = vmatpush1.msra.mxu0 0.0
    %103 = vmatprep.subr.mxu0 0.0
    %104 = vmatpush1.msra.mxu0 0.0
    %105 = vmatprep.subr.mxu0 0.0
    %106 = vmatpush1.msra.mxu0 0.0
    %107 = vmatprep.subr.mxu0 0.0
    %108 = vmatpush1.msra.mxu0 0.0
    %109 = vmatprep.subr.mxu0 0.0
    %110 = vmatpush1.msra.mxu0 0.0
    %111 = vmatprep.subr.mxu0 0.0
    %112 = vmatpush1.msra.mxu0 0.0
    %113 = vmatprep.subr.mxu0 0.0
    %114 = vmatpush1.msra.mxu0 0.0
    %115 = vmatprep.subr.mxu0 0.0
    %116 = vmatpush1.msra.mxu0 0.0
    %117 = vmatprep.subr.mxu0 0.0
    %118 = vmatpush1.msra.mxu0 0.0
    %119 = vmatprep.subr.mxu0 0.0
    %120 = vmatpush1.msra.mxu0 0.0
    %121 = vmatprep.subr.mxu0 0.0
    %122 = vmatpush1.msra.mxu0 0.0
    %123 = vmatprep.subr.mxu0 0.0
    %124 = vmatpush1.msra.mxu0 0.0
    %125 = vmatprep.subr.mxu0 0.0
    %126 = vmatpush1.msra.mxu0 0.0
    %127 = vmatprep.mubr.f32.mxu0 0.0
    %128 = vmatmul.mubr.f32.gmra.mrb[0].mxu0 %v58
    %v129 = vpop.f32.mrb[0].mxu0
    %v130 = vadd.f32 %v54, %v129
    %v131 = vpop.f32.mrb[0].mxu0
    %132 = vmatprep.mubr.f32.mxu0 0.0
    %133 = vmatmul.mubr.f32.gmra.mrb[0].mxu0 %v61
    %v134 = vpop.f32.mrb[0].mxu0
    %v135 = vadd.f32 %v54, %v134
    %v136 = vpop.f32.mrb[0].mxu0
    %137 = vdwg.mxu0
    %v138 = vtanh.pop %v130
    %v139 = vtanh.pop %v135
    %vm140 = vcmask 523264
    %141 = vst.msk [vmem:[#allocation7] sm:$0xff] %vm140, %v138
    %142 = vst.msk [vmem:[#allocation7 + $0x8] sm:$0xff] %vm140, %v139
    // Predicated region
    $region22: #{tpu_custom_call.1} parent=1 // pred_check
      _
    $region23: #{tpu_custom_call.1} parent=1 // pred_check_branch
      %144 = sbr.rel (0) target = $region25
    $region24: #{tpu_custom_call.1} parent=1 // pred_region
      %s146 = ssub.s32 256, 256
      %147 = vsyncadd [#allocation4], %s146
      %s148 = sshll.u32 [#allocation7], 4
      %s149 = int_to_ptr.vmem [resolvable:$true] %s148
      %154 = dma.vmem_to_hbm [thread:$0]  %s149, 256, %s3, [#allocation4], 128, 128, 8
    $region25: #{tpu_custom_call.1} parent=1 // pred_fallthru
      _
    // Predicated region
    $region26: #{tpu_custom_call.1} parent=1 // pred_check
      _
    $region27: #{tpu_custom_call.1} parent=1 // pred_check_branch
      %156 = sbr.rel (0) target = $region29
    $region28: #{tpu_custom_call.1} parent=1 // pred_region
      %157 = dma.done [#allocation4], 256
    $region29: #{tpu_custom_call.1} parent=1 // pred_fallthru
      _
    %158 = vsyncpa [#allocation3], 1
    %159 = vsyncpa [#allocation6], 1
    %160 = vsyncpa [#allocation4], 1

</llo_original>
